<compile_context>
chip_gen: v5e
topology: v5e:2x2
jax: 0.10.0
libtpu: 0.0.40
codegen_flags: <defaults>
</compile_context>

<pallas_src>
import functools
import math

import jax
import jax.numpy as jnp
from jax.experimental import pallas as pl
from jax.experimental.pallas import tpu as pltpu

MASK_VALUE = -1_000_000.0  # matches masked_softmax's fill value in the PyTorch spec


# ----------------------------- fused attention kernel -----------------------------

def _attention_kernel(*refs, scale, use_mask):
    # refs layout:
    #   masked:   q_ref, k_ref, v_ref, vl_ref, out_ref, w_ref
    #   unmasked: q_ref, k_ref, v_ref,          out_ref, w_ref
    if use_mask:
        q_ref, k_ref, v_ref, vl_ref, out_ref, w_ref = refs
    else:
        q_ref, k_ref, v_ref, out_ref, w_ref = refs
        vl_ref = None

    q = q_ref[0]          # (Tq, d)   f32
    k = k_ref[0]          # (Tk, d)   f32
    v = v_ref[0]          # (Tk, dv)  f32

    # scores = Q @ K^T / sqrt(d)   -- contract the feature dim directly (no transpose)
    scores = jax.lax.dot_general(
        q, k, (((1,), (1,)), ((), ())),
        preferred_element_type=jnp.float32) * scale          # (Tq, Tk)

    if use_mask:
        vl = vl_ref[0]                                        # (Tq, 1) int32, per-query valid len
        col = jax.lax.broadcasted_iota(jnp.int32, scores.shape, dimension=1)
        scores = jnp.where(col < vl, scores, MASK_VALUE)

    # numerically-stable softmax over the key axis (same result as F.softmax)
    m = jnp.max(scores, axis=-1, keepdims=True)
    e = jnp.exp(scores - m)
    denom = jnp.sum(e, axis=-1, keepdims=True)
    p = e / denom                                             # (Tq, Tk)

    # TODO(synk): nn.Dropout is treated as identity (p=0.0 / eval mode); stochastic
    # training-mode dropout of attention weights is not implemented.

    w_ref[0] = p
    out_ref[0] = jax.lax.dot_general(
        p, v, (((1,), (0,)), ((), ())),
        preferred_element_type=jnp.float32)                   # (Tq, dv)


def dot_product_attention(queries, keys, values, valid_lens=None):
    """queries: (B, Tq, d), keys: (B, Tk, d), values: (B, Tk, dv).

    valid_lens: None, (B,) or (B, Tq) — same semantics as the PyTorch masked_softmax.
    Returns (output (B, Tq, dv), attention_weights (B, Tq, Tk))."""
    B, Tq, d = queries.shape
    Bk, Tk, dk = keys.shape
    Bv, Tkv, dv = values.shape
    assert B == Bk == Bv and dk == d and Tkv == Tk

    scale = 1.0 / math.sqrt(d)
    use_mask = valid_lens is not None

    inputs = [queries.astype(jnp.float32),
              keys.astype(jnp.float32),
              values.astype(jnp.float32)]
    in_specs = [
        pl.BlockSpec((1, Tq, d), lambda b: (b, 0, 0)),
        pl.BlockSpec((1, Tk, d), lambda b: (b, 0, 0)),
        pl.BlockSpec((1, Tk, dv), lambda b: (b, 0, 0)),
    ]
    if use_mask:
        vl = jnp.asarray(valid_lens)
        if vl.ndim == 1:
            # torch.repeat_interleave(valid_lens, Tq): every query row of batch b uses valid_lens[b]
            vl2d = jnp.broadcast_to(vl[:, None], (B, Tq))
        else:
            vl2d = vl
        inputs.append(vl2d.astype(jnp.int32).reshape(B, Tq, 1))
        in_specs.append(pl.BlockSpec((1, Tq, 1), lambda b: (b, 0, 0)))

    kernel = functools.partial(_attention_kernel, scale=scale, use_mask=use_mask)

    out, weights = pl.pallas_call(
        kernel,
        out_shape=(jax.ShapeDtypeStruct((B, Tq, dv), jnp.float32),
                   jax.ShapeDtypeStruct((B, Tq, Tk), jnp.float32)),
        grid_spec=pltpu.PrefetchScalarGridSpec(
            num_scalar_prefetch=0,
            grid=(B,),
            in_specs=in_specs,
            out_specs=(pl.BlockSpec((1, Tq, dv), lambda b: (b, 0, 0)),
                       pl.BlockSpec((1, Tq, Tk), lambda b: (b, 0, 0)))),
        compiler_params=pltpu.CompilerParams(
            dimension_semantics=("parallel",)),
    )(*inputs)
    return out, weights


# ----------------------------- demo / self-check -----------------------------

if __name__ == "__main__":
    key = jax.random.PRNGKey(0)
    kq, kk, kv = jax.random.split(key, 3)

    B, Tq, Tk, d, dv = 2, 8, 8, 32, 32
    queries = jax.random.normal(kq, (B, Tq, d), jnp.float32)
    keys = jax.random.normal(kk, (B, Tk, d), jnp.float32)
    values = jax.random.normal(kv, (B, Tk, dv), jnp.float32)
    valid_lens = jnp.array([3, 6], jnp.int32)

    fwd = jax.jit(dot_product_attention)

    # masked path
    out, attn_w = jax.block_until_ready(fwd(queries, keys, values, valid_lens))

    # pure-JAX reference (identical semantics to the PyTorch module with dropout p=0)
    scores = jnp.einsum("bqd,bkd->bqk", queries, keys) / math.sqrt(d)
    mask = jnp.arange(Tk)[None, None, :] < valid_lens[:, None, None]
    scores = jnp.where(mask, scores, MASK_VALUE)
    ref_w = jax.nn.softmax(scores, axis=-1)
    ref_out = jnp.einsum("bqk,bkv->bqv", ref_w, values)

    assert out.shape == (B, Tq, dv), out.shape
    assert attn_w.shape == (B, Tq, Tk), attn_w.shape
    assert bool(jnp.all(jnp.isfinite(out)))
    assert bool(jnp.allclose(out, ref_out, atol=1e-5, rtol=1e-5))
    assert bool(jnp.allclose(attn_w, ref_w, atol=1e-6, rtol=1e-5))

    # unmasked path (valid_lens=None)
    out_nm, attn_nm = jax.block_until_ready(fwd(queries, keys, values, None))
    ref_w_nm = jax.nn.softmax(
        jnp.einsum("bqd,bkd->bqk", queries, keys) / math.sqrt(d), axis=-1)
    ref_out_nm = jnp.einsum("bqk,bkv->bqv", ref_w_nm, values)
    assert bool(jnp.allclose(out_nm, ref_out_nm, atol=1e-5, rtol=1e-5))
    assert bool(jnp.allclose(attn_nm, ref_w_nm, atol=1e-6, rtol=1e-5))

    print("KERNEL_OK")
</pallas_src>

<mosaic_0001>
module attributes {stable_mosaic.version = 11 : i64} {
  func.func @_attention_kernel(%arg0: i32, %arg1: memref<1x8x32xf32, #tpu.memory_space<vmem>>, %arg2: memref<1x8x32xf32, #tpu.memory_space<vmem>>, %arg3: memref<1x8x32xf32, #tpu.memory_space<vmem>>, %arg4: memref<1x8x1xi32, #tpu.memory_space<vmem>>, %arg5: memref<1x8x32xf32, #tpu.memory_space<vmem>>, %arg6: memref<1x8x8xf32, #tpu.memory_space<vmem>>) attributes {dimension_semantics = [#tpu.dimension_semantics<parallel>], iteration_bounds = array<i64: 2>, scalar_prefetch = 0 : i64, scratch_operands = 0 : i64, tpu.core_type = #tpu.core_type<tc>, window_params = [{transform_indices = @transform_0, window_bounds = array<i64: 1, 8, 32>}, {transform_indices = @transform_1, window_bounds = array<i64: 1, 8, 32>}, {transform_indices = @transform_2, window_bounds = array<i64: 1, 8, 32>}, {transform_indices = @transform_3, window_bounds = array<i64: 1, 8, 1>}, {transform_indices = @transform_4, window_bounds = array<i64: 1, 8, 32>}, {transform_indices = @transform_5, window_bounds = array<i64: 1, 8, 8>}]} {
    %c0 = arith.constant 0 : index
    %c0_0 = arith.constant 0 : index
    %c0_1 = arith.constant 0 : index
    %0 = vector.load %arg1[%c0, %c0_0, %c0_1] : memref<1x8x32xf32, #tpu.memory_space<vmem>>, vector<1x8x32xf32>
    %1 = vector.shape_cast %0 : vector<1x8x32xf32> to vector<8x32xf32>
    %c0_2 = arith.constant 0 : index
    %c0_3 = arith.constant 0 : index
    %c0_4 = arith.constant 0 : index
    %2 = vector.load %arg2[%c0_2, %c0_3, %c0_4] : memref<1x8x32xf32, #tpu.memory_space<vmem>>, vector<1x8x32xf32>
    %3 = vector.shape_cast %2 : vector<1x8x32xf32> to vector<8x32xf32>
    %c0_5 = arith.constant 0 : index
    %c0_6 = arith.constant 0 : index
    %c0_7 = arith.constant 0 : index
    %4 = vector.load %arg3[%c0_5, %c0_6, %c0_7] : memref<1x8x32xf32, #tpu.memory_space<vmem>>, vector<1x8x32xf32>
    %5 = vector.shape_cast %4 : vector<1x8x32xf32> to vector<8x32xf32>
    %cst = arith.constant dense<0.000000e+00> : vector<8x8xf32>
    %6 = tpu.matmul %1, %3, %cst {dimension_numbers = #tpu.dot_dimension_numbers<[1], [1], [0], [0], [0, 0, 1, 0], [], []>} : vector<8x32xf32>, vector<8x32xf32>, vector<8x8xf32> -> vector<8x8xf32>
    %cst_8 = arith.constant 0.176776692 : f32
    %7 = vector.broadcast %cst_8 : f32 to vector<8x8xf32>
    %8 = arith.mulf %6, %7 : vector<8x8xf32>
    %c0_9 = arith.constant 0 : index
    %c0_10 = arith.constant 0 : index
    %c0_11 = arith.constant 0 : index
    %9 = vector.load %arg4[%c0_9, %c0_10, %c0_11] : memref<1x8x1xi32, #tpu.memory_space<vmem>>, vector<1x8x1xi32>
    %10 = vector.shape_cast %9 : vector<1x8x1xi32> to vector<8x1xi32>
    %11 = tpu.iota {dimensions = array<i32: 1>} : vector<8x8xi32>
    %12 = vector.broadcast %10 : vector<8x1xi32> to vector<8x8xi32>
    %13 = arith.cmpi slt, %11, %12 : vector<8x8xi32>
    %cst_12 = arith.constant -1.000000e+06 : f32
    %14 = vector.broadcast %cst_12 : f32 to vector<8x8xf32>
    %15 = arith.select %13, %8, %14 : vector<8x8xi1>, vector<8x8xf32>
    %cst_13 = arith.constant dense<0xFF800000> : vector<8xf32>
    %16 = vector.multi_reduction <maximumf>, %15, %cst_13 [1] : vector<8x8xf32> to vector<8xf32>
    %17 = vector.shape_cast %16 : vector<8xf32> to vector<8x1xf32>
    %18 = vector.broadcast %17 : vector<8x1xf32> to vector<8x8xf32>
    %19 = arith.subf %15, %18 : vector<8x8xf32>
    %20 = math.exp %19 : vector<8x8xf32>
    %cst_14 = arith.constant dense<0.000000e+00> : vector<8xf32>
    %21 = vector.multi_reduction <add>, %20, %cst_14 [1] : vector<8x8xf32> to vector<8xf32>
    %22 = vector.shape_cast %21 : vector<8xf32> to vector<8x1xf32>
    %23 = vector.broadcast %22 : vector<8x1xf32> to vector<8x8xf32>
    %24 = arith.divf %20, %23 : vector<8x8xf32>
    %c0_15 = arith.constant 0 : index
    %c0_16 = arith.constant 0 : index
    %c0_17 = arith.constant 0 : index
    %25 = vector.load %arg6[%c0_15, %c0_16, %c0_17] : memref<1x8x8xf32, #tpu.memory_space<vmem>>, vector<1x8x8xf32>
    %26 = vector.shape_cast %25 : vector<1x8x8xf32> to vector<8x8xf32>
    %27 = vector.shape_cast %24 : vector<8x8xf32> to vector<1x8x8xf32>
    tpu.vector_store %arg6[%c0_15, %c0_16, %c0_17], %27 {strides = array<i32>} : memref<1x8x8xf32, #tpu.memory_space<vmem>>, vector<1x8x8xf32>,
    %cst_18 = arith.constant dense<0.000000e+00> : vector<8x32xf32>
    %28 = tpu.matmul %24, %5, %cst_18 {dimension_numbers = #tpu.dot_dimension_numbers<[1], [0], [0], [1], [0, 0, 1, 1], [], []>} : vector<8x8xf32>, vector<8x32xf32>, vector<8x32xf32> -> vector<8x32xf32>
    %c0_19 = arith.constant 0 : index
    %c0_20 = arith.constant 0 : index
    %c0_21 = arith.constant 0 : index
    %29 = vector.load %arg5[%c0_19, %c0_20, %c0_21] : memref<1x8x32xf32, #tpu.memory_space<vmem>>, vector<1x8x32xf32>
    %30 = vector.shape_cast %29 : vector<1x8x32xf32> to vector<8x32xf32>
    %31 = vector.shape_cast %28 : vector<8x32xf32> to vector<1x8x32xf32>
    tpu.vector_store %arg5[%c0_19, %c0_20, %c0_21], %31 {strides = array<i32>} : memref<1x8x32xf32, #tpu.memory_space<vmem>>, vector<1x8x32xf32>,
    return
  }
  func.func @transform_0(%arg0: i32) -> (i32, i32, i32) {
    %c0_i32 = arith.constant 0 : i32
    %c0_i32_0 = arith.constant 0 : i32
    %c0_i32_1 = arith.constant 0 : i32
    return %arg0, %c0_i32, %c0_i32_0 : i32, i32, i32
  }
  func.func @transform_1(%arg0: i32) -> (i32, i32, i32) {
    %c0_i32 = arith.constant 0 : i32
    %c0_i32_0 = arith.constant 0 : i32
    %c0_i32_1 = arith.constant 0 : i32
    return %arg0, %c0_i32, %c0_i32_0 : i32, i32, i32
  }
  func.func @transform_2(%arg0: i32) -> (i32, i32, i32) {
    %c0_i32 = arith.constant 0 : i32
    %c0_i32_0 = arith.constant 0 : i32
    %c0_i32_1 = arith.constant 0 : i32
    return %arg0, %c0_i32, %c0_i32_0 : i32, i32, i32
  }
  func.func @transform_3(%arg0: i32) -> (i32, i32, i32) {
    %c0_i32 = arith.constant 0 : i32
    %c0_i32_0 = arith.constant 0 : i32
    %c0_i32_1 = arith.constant 0 : i32
    return %arg0, %c0_i32, %c0_i32_0 : i32, i32, i32
  }
  func.func @transform_4(%arg0: i32) -> (i32, i32, i32) {
    %c0_i32 = arith.constant 0 : i32
    %c0_i32_0 = arith.constant 0 : i32
    %c0_i32_1 = arith.constant 0 : i32
    return %arg0, %c0_i32, %c0_i32_0 : i32, i32, i32
  }
  func.func @transform_5(%arg0: i32) -> (i32, i32, i32) {
    %c0_i32 = arith.constant 0 : i32
    %c0_i32_0 = arith.constant 0 : i32
    %c0_i32_1 = arith.constant 0 : i32
    return %arg0, %c0_i32, %c0_i32_0 : i32, i32, i32
  }
}

</mosaic_0001>

<llo_original>
// kernel: dot_product_attention.1
$region0: #{dot_product_attention.1}
  #allocation0 [shape = 'u32[]', space=smem, size = 0x4, offset = 0x4, fixed_abs, tag = 'smem constant byte address 0x4 - core index']
  #allocation1 [shape = 'u32[72,128]{1,0:T(1,128)}', space=vmem, size = 0x9000, scoped, tag = 'internal scratch']
  %s0 = inlined_call_operand.vmem [shape: f32[2,8,32], index: 0, kind: input, shape index: {}]
  %s1 = inlined_call_operand.hbm [shape: f32[2,8,32], index: 1, kind: input, shape index: {}]
  %s2 = inlined_call_operand.hbm [shape: f32[2,8,32], index: 2, kind: input, shape index: {}]
  %s3 = inlined_call_operand.vmem [shape: s32[2,8,1], index: 3, kind: input, shape index: {}]
  %s4 = inlined_call_operand.hbm [shape: f32[2,8,32], index: 4, kind: output, shape index: {0}]
  %s5 = inlined_call_operand.hbm [shape: f32[2,8,8], index: 5, kind: output, shape index: {1}]
  %6 = xla_tuple %s4, %s5
  %s7 = sld [smem:[#allocation0]]
  $region65: #{dot_product_attention.1} parent=0
    _
  %s9 = ssub.s32 1, %s7
  %s10 = scalar_select 0, %s9, %s7
  $region1: #{dot_product_attention.1} parent=0
    #allocation2 [shape = 'u8[8192]{0}', space=vmem, size = 0x2000, scoped, tag = 'input window, operand 1']
    #allocation3 [shape = 's32[2]{0}', space=sflag, size = 0x8, scoped, tag = 'scoped memory for dot_product_attention.1']
    #allocation4 [shape = 's32[2]{0}', space=sflag, size = 0x8, scoped, tag = 'scoped memory for dot_product_attention.1']
    #allocation5 [shape = 'u8[8192]{0}', space=vmem, size = 0x2000, scoped, tag = 'input window, operand 2']
    #allocation6 [shape = 's32[2]{0}', space=sflag, size = 0x8, scoped, tag = 'scoped memory for dot_product_attention.1']
    #allocation7 [shape = 'u8[8192]{0}', space=vmem, size = 0x2000, scoped, tag = 'output window, operand 0']
    #allocation8 [shape = 'u8[8192]{0}', space=vmem, size = 0x2000, scoped, tag = 'output window, operand 1']
    #allocation9 [shape = 's32[2]{0}', space=sflag, size = 0x8, scoped, tag = 'scoped memory for dot_product_attention.1']
    %11 = vsyncpa [#allocation3], 0
    %s12 = scalar_lea.sflag [#allocation3], 1
    %13 = vsyncpa %s12, 0
    %14 = vsyncpa [#allocation6], 0
    %s15 = scalar_lea.sflag [#allocation6], 1
    %16 = vsyncpa %s15, 0
    %17 = vsyncpa [#allocation4], 0
    %s18 = scalar_lea.sflag [#allocation4], 1
    %19 = vsyncpa %s18, 0
    %20 = vsyncpa [#allocation9], 0
    %s21 = scalar_lea.sflag [#allocation9], 1
    %22 = vsyncpa %s21, 0
    loop: start=0, step=1, limit=4
    $region2: #{dot_product_attention.1} parent=1 // loop_pre_header
      _
    $region3: #{dot_product_attention.1} parent=1 // loop_header
      %s24 = sphi 0, %s28
      %p25 = scmp.ge.s32.totalorder %s24, 4
      %s34 = sphi 0, %s36
      %s37 = sphi 0, %s34
      %s38 = sphi 0, %s37
      %s54 = sphi 0, %s38
      %s60 = sphi 0, %s62
      %s63 = sphi 0, %s60
      %s64 = sphi 0, %s63
      %s80 = sphi 0, %s64
      %s86 = sphi 0, %s88
      %s89 = sphi 0, %s86
      %s90 = sphi 0, %s89
      %s106 = sphi 0, %s90
      %s112 = sphi 0, %s114
      %s115 = sphi 0, %s112
      %s116 = sphi 0, %s115
      %s132 = sphi 0, %s116
      %s138 = sphi 0, %s140
      %s141 = sphi 0, %s138
      %s142 = sphi 0, %s141
      %s158 = sphi 0, %s142
      %s164 = sphi 0, %s166
      %s167 = sphi 0, %s164
      %s168 = sphi 0, %s167
      %s184 = sphi 0, %s168
    $region4: #{dot_product_attention.1} parent=1 // loop_header_branch
      %27 = sbr.rel (%p25) target = $region8
    $region5: #{dot_product_attention.1} parent=1 // loop_body
      %s29 = ssub.s32 %s24, 1
      %s30 = ssub.s32 %s24, 2
      %s31 = sadd.s32 %s24, 1
      %s32 = ssub.s32 %s24, %s31
      %p33 = scmp.eq.s32.totalorder %s32, 0
      %s35 = sadd.s32 %s34, 1
      %s36 = scalar_select %p33, %s34, %s35
      %p39 = pneg %p33
      %p40 = scmp.eq.s32.totalorder %s24, 1
      %p41 = por %p39, %p40
      %p42 = scmp.ne.s32.totalorder %s34, %s37
      %p43 = scmp.eq.s32.totalorder %s24, 0
      %p44 = por %p42, %p43
      %p45 = scmp.ne.s32.totalorder %s34, %s37
      %p46 = scmp.eq.s32.totalorder %s29, 1
      %p47 = por %p45, %p46
      %p48 = scmp.ne.s32.totalorder %s37, %s38
      %p49 = scmp.eq.s32.totalorder %s29, 0
      %p50 = por %p48, %p49
      %p51 = scmp.ne.s32.totalorder %s37, %s38
      %p52 = scmp.eq.s32.totalorder %s30, 1
      %p53 = por %p51, %p52
      %p55 = scmp.ne.s32.totalorder %s38, %s54
      %p56 = scmp.eq.s32.totalorder %s30, 0
      %p57 = por %p55, %p56
      %s58 = ssub.s32 %s24, %s31
      %p59 = scmp.eq.s32.totalorder %s58, 0
      %s61 = sadd.s32 %s60, 1
      %s62 = scalar_select %p59, %s60, %s61
      %p65 = pneg %p59
      %p66 = scmp.eq.s32.totalorder %s24, 1
      %p67 = por %p65, %p66
      %p68 = scmp.ne.s32.totalorder %s60, %s63
      %p69 = scmp.eq.s32.totalorder %s24, 0
      %p70 = por %p68, %p69
      %p71 = scmp.ne.s32.totalorder %s60, %s63
      %p72 = scmp.eq.s32.totalorder %s29, 1
      %p73 = por %p71, %p72
      %p74 = scmp.ne.s32.totalorder %s63, %s64
      %p75 = scmp.eq.s32.totalorder %s29, 0
      %p76 = por %p74, %p75
      %p77 = scmp.ne.s32.totalorder %s63, %s64
      %p78 = scmp.eq.s32.totalorder %s30, 1
      %p79 = por %p77, %p78
      %p81 = scmp.ne.s32.totalorder %s64, %s80
      %p82 = scmp.eq.s32.totalorder %s30, 0
      %p83 = por %p81, %p82
      %s84 = ssub.s32 %s24, %s31
      %p85 = scmp.eq.s32.totalorder %s84, 0
      %s87 = sadd.s32 %s86, 1
      %s88 = scalar_select %p85, %s86, %s87
      %p91 = pneg %p85
      %p92 = scmp.eq.s32.totalorder %s24, 1
      %p93 = por %p91, %p92
      %p94 = scmp.ne.s32.totalorder %s86, %s89
      %p95 = scmp.eq.s32.totalorder %s24, 0
      %p96 = por %p94, %p95
      %p97 = scmp.ne.s32.totalorder %s86, %s89
      %p98 = scmp.eq.s32.totalorder %s29, 1
      %p99 = por %p97, %p98
      %p100 = scmp.ne.s32.totalorder %s89, %s90
      %p101 = scmp.eq.s32.totalorder %s29, 0
      %p102 = por %p100, %p101
      %p103 = scmp.ne.s32.totalorder %s89, %s90
      %p104 = scmp.eq.s32.totalorder %s30, 1
      %p105 = por %p103, %p104
      %p107 = scmp.ne.s32.totalorder %s90, %s106
      %p108 = scmp.eq.s32.totalorder %s30, 0
      %p109 = por %p107, %p108
      %s110 = ssub.s32 %s24, %s31
      %p111 = scmp.eq.s32.totalorder %s110, 0
      %s113 = sadd.s32 %s112, 1
      %s114 = scalar_select %p111, %s112, %s113
      %p117 = pneg %p111
      %p118 = scmp.eq.s32.totalorder %s24, 1
      %p119 = por %p117, %p118
      %p120 = scmp.ne.s32.totalorder %s112, %s115
      %p121 = scmp.eq.s32.totalorder %s24, 0
      %p122 = por %p120, %p121
      %p123 = scmp.ne.s32.totalorder %s112, %s115
      %p124 = scmp.eq.s32.totalorder %s29, 1
      %p125 = por %p123, %p124
      %p126 = scmp.ne.s32.totalorder %s115, %s116
      %p127 = scmp.eq.s32.totalorder %s29, 0
      %p128 = por %p126, %p127
      %p129 = scmp.ne.s32.totalorder %s115, %s116
      %p130 = scmp.eq.s32.totalorder %s30, 1
      %p131 = por %p129, %p130
      %p133 = scmp.ne.s32.totalorder %s116, %s132
      %p134 = scmp.eq.s32.totalorder %s30, 0
      %p135 = por %p133, %p134
      %s136 = ssub.s32 %s24, %s31
      %p137 = scmp.eq.s32.totalorder %s136, 0
      %s139 = sadd.s32 %s138, 1
      %s140 = scalar_select %p137, %s138, %s139
      %p143 = pneg %p137
      %p144 = scmp.eq.s32.totalorder %s24, 1
      %p145 = por %p143, %p144
      %p146 = scmp.ne.s32.totalorder %s138, %s141
      %p147 = scmp.eq.s32.totalorder %s24, 0
      %p148 = por %p146, %p147
      %p149 = scmp.ne.s32.totalorder %s138, %s141
      %p150 = scmp.eq.s32.totalorder %s29, 1
      %p151 = por %p149, %p150
      %p152 = scmp.ne.s32.totalorder %s141, %s142
      %p153 = scmp.eq.s32.totalorder %s29, 0
      %p154 = por %p152, %p153
      %p155 = scmp.ne.s32.totalorder %s141, %s142
      %p156 = scmp.eq.s32.totalorder %s30, 1
      %p157 = por %p155, %p156
      %p159 = scmp.ne.s32.totalorder %s142, %s158
      %p160 = scmp.eq.s32.totalorder %s30, 0
      %p161 = por %p159, %p160
      %s162 = ssub.s32 %s24, %s31
      %p163 = scmp.eq.s32.totalorder %s162, 0
      %s165 = sadd.s32 %s164, 1
      %s166 = scalar_select %p163, %s164, %s165
      %p169 = pneg %p163
      %p170 = scmp.eq.s32.totalorder %s24, 1
      %p171 = por %p169, %p170
      %p172 = scmp.ne.s32.totalorder %s164, %s167
      %p173 = scmp.eq.s32.totalorder %s24, 0
      %p174 = por %p172, %p173
      %p175 = scmp.ne.s32.totalorder %s164, %s167
      %p176 = scmp.eq.s32.totalorder %s29, 1
      %p177 = por %p175, %p176
      %p178 = scmp.ne.s32.totalorder %s167, %s168
      %p179 = scmp.eq.s32.totalorder %s29, 0
      %p180 = por %p178, %p179
      %p181 = scmp.ne.s32.totalorder %s167, %s168
      %p182 = scmp.eq.s32.totalorder %s30, 1
      %p183 = por %p181, %p182
      %p185 = scmp.ne.s32.totalorder %s168, %s184
      %p186 = scmp.eq.s32.totalorder %s30, 0
      %p187 = por %p185, %p186
      %p188 = scmp.le.s32.totalorder 1, %s24
      %p189 = scmp.lt.s32.totalorder %s24, 3
      %p190 = pnand %p188, %p189
      %p191 = pneg %p190
      // Predicated region
      $region9: #{dot_product_attention.1} parent=5 // pred_check
        _
      $region10: #{dot_product_attention.1} parent=5 // pred_check_branch
        %193 = sbr.rel (%p190) target = $region12
      $region11: #{dot_product_attention.1} parent=5 // pred_region
        %s194 = ssub.s32 %s24, 1
      $region12: #{dot_product_attention.1} parent=5 // pred_fallthru
        _
      %p195 = scmp.lt.s32.totalorder %s24, 2
      // Predicated region
      $region13: #{dot_product_attention.1} parent=5 // pred_check
        %p196 = pneg %p195
      $region14: #{dot_product_attention.1} parent=5 // pred_check_branch
        %198 = sbr.rel (%p196) target = $region16
      $region15: #{dot_product_attention.1} parent=5 // pred_region
        // Predicated region
        $region17: #{dot_product_attention.1} parent=15 // pred_check
          %p199 = pneg %p44
        $region18: #{dot_product_attention.1} parent=15 // pred_check_branch
          %201 = sbr.rel (%p199) target = $region20
        $region19: #{dot_product_attention.1} parent=15 // pred_region
          %p202 = scmp.lt.s32.totalorder %s24, 1
          %s203 = scalar_select %p202, %s24, 1
          %s204 = smul.addr %s203, 8
          %s205 = scalar_lea.vmem %s0, %s204
        $region20: #{dot_product_attention.1} parent=15 // pred_fallthru
          _
        // Predicated region
        $region21: #{dot_product_attention.1} parent=15 // pred_check
          %p206 = pneg %p70
        $region22: #{dot_product_attention.1} parent=15 // pred_check_branch
          %208 = sbr.rel (%p206) target = $region24
        $region23: #{dot_product_attention.1} parent=15 // pred_region
          %s209 = sand.u32 %s60, 1
          %s210 = scalar_lea.sflag [#allocation3], %s209
          %s211 = sand.u32 %s60, 1
          %s212 = smul.addr %s211, 8
          %s213 = scalar_lea.vmem [#allocation2], %s212
          %215 = vsyncadd %s210, 0
          %s216 = smul.addr %s24, 8
          %s217 = scalar_lea.hbm %s1, %s216
          %s219 = sshll.u32 %s217, 4
          %s220 = int_to_ptr.hbm [resolvable:$true] %s219
          %s221 = sshll.u32 %s213, 4
          %s222 = int_to_ptr.vmem [resolvable:$true] %s221
          %224 = dma.hbm_to_vmem [thread:$0]  %s220, 128, %s222, %s210
        $region24: #{dot_product_attention.1} parent=15 // pred_fallthru
          _
        // Predicated region
        $region25: #{dot_product_attention.1} parent=15 // pred_check
          %p225 = pneg %p96
        $region26: #{dot_product_attention.1} parent=15 // pred_check_branch
          %227 = sbr.rel (%p225) target = $region28
        $region27: #{dot_product_attention.1} parent=15 // pred_region
          %s228 = sand.u32 %s86, 1
          %s229 = scalar_lea.sflag [#allocation6], %s228
          %s230 = sand.u32 %s86, 1
          %s231 = smul.addr %s230, 8
          %s232 = scalar_lea.vmem [#allocation5], %s231
          %234 = vsyncadd %s229, 0
          %s235 = smul.addr %s24, 8
          %s236 = scalar_lea.hbm %s2, %s235
          %s238 = sshll.u32 %s236, 4
          %s239 = int_to_ptr.hbm [resolvable:$true] %s238
          %s240 = sshll.u32 %s232, 4
          %s241 = int_to_ptr.vmem [resolvable:$true] %s240
          %243 = dma.hbm_to_vmem [thread:$0]  %s239, 128, %s241, %s229
        $region28: #{dot_product_attention.1} parent=15 // pred_fallthru
          _
        // Predicated region
        $region29: #{dot_product_attention.1} parent=15 // pred_check
          %p244 = pneg %p122
        $region30: #{dot_product_attention.1} parent=15 // pred_check_branch
          %246 = sbr.rel (%p244) target = $region32
        $region31: #{dot_product_attention.1} parent=15 // pred_region
          %p247 = scmp.lt.s32.totalorder %s24, 1
          %s248 = scalar_select %p247, %s24, 1
          %s249 = smul.addr %s248, 8
          %s250 = scalar_lea.vmem %s3, %s249
        $region32: #{dot_product_attention.1} parent=15 // pred_fallthru
          _
      $region16: #{dot_product_attention.1} parent=5 // pred_fallthru
        _
      %p251 = scmp.le.s32.totalorder 1, %s24
      %p252 = scmp.lt.s32.totalorder %s24, 3
      %p253 = pnand %p251, %p252
      %p254 = pneg %p253
      // Predicated region
      $region33: #{dot_product_attention.1} parent=5 // pred_check
        _
      $region34: #{dot_product_attention.1} parent=5 // pred_check_branch
        %256 = sbr.rel (%p253) target = $region36
      $region35: #{dot_product_attention.1} parent=5 // pred_region
        %s257 = ssub.s32 %s24, 1
        %s258 = sand.u32 %s63, 1
        %s259 = scalar_lea.sflag [#allocation3], %s258
        %s260 = sand.u32 %s63, 1
        %s261 = smul.addr %s260, 8
        %s262 = scalar_lea.vmem [#allocation2], %s261
        // Predicated region
        $region37: #{dot_product_attention.1} parent=35 // pred_check
          %p263 = pneg %p76
        $region38: #{dot_product_attention.1} parent=35 // pred_check_branch
          %265 = sbr.rel (%p263) target = $region40
        $region39: #{dot_product_attention.1} parent=35 // pred_region
          %267 = dma.done %s259, 128
        $region40: #{dot_product_attention.1} parent=35 // pred_fallthru
          _
        %s268 = sand.u32 %s89, 1
        %s269 = scalar_lea.sflag [#allocation6], %s268
        %s270 = sand.u32 %s89, 1
        %s271 = smul.addr %s270, 8
        %s272 = scalar_lea.vmem [#allocation5], %s271
        // Predicated region
        $region41: #{dot_product_attention.1} parent=35 // pred_check
          %p273 = pneg %p102
        $region42: #{dot_product_attention.1} parent=35 // pred_check_branch
          %275 = sbr.rel (%p273) target = $region44
        $region43: #{dot_product_attention.1} parent=35 // pred_region
          %277 = dma.done %s269, 128
        $region44: #{dot_product_attention.1} parent=35 // pred_fallthru
          _
        %p278 = scmp.lt.s32.totalorder %s29, 1
        %s279 = scalar_select %p278, %s29, 1
        %s280 = smul.addr %s279, 8
        %s281 = scalar_lea.vmem %s0, %s280
        %p282 = pneg %p50
        %p283 = pneg %p47
        %s284 = sand.u32 %s63, 1
        %s285 = scalar_lea.sflag [#allocation3], %s284
        %s286 = sand.u32 %s63, 1
        %s287 = smul.addr %s286, 8
        %s288 = scalar_lea.vmem [#allocation2], %s287
        %p289 = pneg %p76
        %p290 = pneg %p73
        %s291 = sand.u32 %s89, 1
        %s292 = scalar_lea.sflag [#allocation6], %s291
        %s293 = sand.u32 %s89, 1
        %s294 = smul.addr %s293, 8
        %s295 = scalar_lea.vmem [#allocation5], %s294
        %p296 = pneg %p102
        %p297 = pneg %p99
        %p298 = scmp.lt.s32.totalorder %s29, 1
        %s299 = scalar_select %p298, %s29, 1
        %s300 = smul.addr %s299, 8
        %s301 = scalar_lea.vmem %s3, %s300
        %p302 = pneg %p128
        %p303 = pneg %p125
        %p304 = pneg %p154
        %p305 = pneg %p151
        %s306 = sand.u32 %s141, 1
        %s307 = scalar_lea.sflag [#allocation4], %s306
        %s308 = sand.u32 %s141, 1
        %s309 = smul.addr %s308, 8
        %s310 = scalar_lea.vmem [#allocation7], %s309
        %p311 = pneg %p180
        %p312 = pneg %p177
        %s313 = sand.u32 %s167, 1
        %s314 = scalar_lea.sflag [#allocation9], %s313
        %s315 = sand.u32 %s167, 1
        %s316 = smul.addr %s315, 8
        %s317 = scalar_lea.vmem [#allocation8], %s316
        %p318 = scmp.lt.s32.totalorder %s29, 1
        %s319 = scalar_select %p318, %s29, 1
        %s320 = smul.addr %s319, 8
        %s321 = scalar_lea.vmem %s0, %s320
        %p322 = scmp.lt.s32.totalorder %s29, 1
        %s323 = scalar_select %p322, %s29, 1
        %s324 = smul.addr %s323, 8
        %s325 = scalar_lea.vmem %s3, %s324
        %v326 = vld [vmem:[%s321] sm:$0xff]
        %v327 = vld [vmem:[%s262] sm:$0xff]
        %v328 = vld [vmem:[%s272] sm:$0xff]
        %vm329 = vcmask 261120
        %v331 = vsel %vm329, %v326, 0
        %v334 = vsel %vm329, %v327, 0
        %336 = vmatpush.xpose.msra.mxu0 0.0
        %337 = vmatpush.xpose.msra.mxu0 0.0
        %338 = vmatpush.xpose.msra.mxu0 0.0
        %339 = vmatpush.xpose.msra.mxu0 0.0
        %340 = vmatpush.xpose.msra.mxu0 0.0
        %341 = vmatpush.xpose.msra.mxu0 0.0
        %342 = vmatpush.xpose.msra.mxu0 0.0
        %343 = vmatpush.xpose.msra.mxu0 0.0
        %344 = vmatpush.xpose.msra.mxu0 0.0
        %345 = vmatpush.xpose.msra.mxu0 0.0
        %346 = vmatpush.xpose.msra.mxu0 0.0
        %347 = vmatpush.xpose.msra.mxu0 0.0
        %348 = vmatpush.xpose.msra.mxu0 0.0
        %349 = vmatpush.xpose.msra.mxu0 0.0
        %350 = vmatpush.xpose.msra.mxu0 0.0
        %351 = vmatpush.xpose.msra.mxu0 %v334
        %352 = vmatmul.f32.gmra.mxu0 %v331
        %v353 = vpop.f32.mrf.mxu0
        %v354 = vadd.f32 0.0, %v353
        %355 = vdwg.mxu0
        %v356 = vmul.f32 %v354, 0.17677669
        %v357 = vld [vmem:[%s325] sm:$0xff]
        %v358 = vlaneseq
        %v359 = vand.u32 %v358, 127
        %360 = vset.pattern.permute.xlu0 0
        %361 = vperm.xlu0 %360, %v357
        %v362 = vpop.permute.xlu0 %361
        %vm363 = vcmp.lt.s32.totalorder %v359, %v362
        %v364 = vsel %vm363, %v356, -1000000.0
        %vm365 = vcmask 64512
        %v366 = vsel %vm365, %v364, -inf
        %367 = vmax.xlane.f32.xlu0 %v366
        %v368 = vpop.xlane.xlu0 %367
        %v369 = vsub.f32 %v364, %v368
        %v370 = vmul.f32 %v369, 1.442695
        %v371 = vpow.pop %v370
        %v372 = vsel %vm365, %v371, 0.0
        %373 = vadd.xlane.f32.xlu0 %v372
        %v374 = vpop.xlane.xlu0 %373
        %v375 = vrcp.pop %v374
        %v376 = vmul.f32 %v374, %v375
        %v377 = vsub.f32 1.0, %v376
        %v378 = vmul.f32 %v375, %v377
        %v379 = vadd.f32 %v375, %v378
        %vm380 = vweird.f32 %v374
        %vm381 = vweird.f32 %v375
        %vm382 = vmor %vm380, %vm381
        %v383 = vsel %vm382, %v375, %v379
        %v384 = vand.u32 2147483647, %v374
        %vm385 = vcmp.eq.f32.partialorder %v384, 8.507059e+37
        %v386 = vand.u32 %v374, 2147483648
        %v387 = vor.u32 1.1754944e-38, %v386
        %v388 = vsel %vm385, %v387, %v383
        %v389 = vmul.f32 %v371, %v388
        %390 = vst.msk [vmem:[%s317] sm:$0xff] %vm365, %v389
        %v392 = vsel %vm365, %v389, 0
        %394 = vmatpush.msra.mxu0 0.0
        %395 = vmatpush.msra.mxu0 0.0
        %396 = vmatpush.msra.mxu0 0.0
        %397 = vmatpush.msra.mxu0 0.0
        %398 = vmatpush.msra.mxu0 0.0
        %399 = vmatpush.msra.mxu0 0.0
        %400 = vmatpush.msra.mxu0 0.0
        %401 = vmatpush.msra.mxu0 0.0
        %402 = vmatpush.msra.mxu0 0.0
        %403 = vmatpush.msra.mxu0 0.0
        %404 = vmatpush.msra.mxu0 0.0
        %405 = vmatpush.msra.mxu0 0.0
        %406 = vmatpush.msra.mxu0 0.0
        %407 = vmatpush.msra.mxu0 0.0
        %408 = vmatpush.msra.mxu0 0.0
        %409 = vmatpush.msra.mxu0 %v328
        %410 = vmatmul.f32.gmra.mxu0 %v392
        %v411 = vpop.f32.mrf.mxu0
        %v412 = vadd.f32 0.0, %v411
        %413 = vdwg.mxu0
        %414 = vst.msk [vmem:[%s310] sm:$0xff] %vm329, %v412
        %s415 = sand.u32 %s141, 1
        %s416 = scalar_lea.sflag [#allocation4], %s415
        %s417 = sand.u32 %s141, 1
        %s418 = smul.addr %s417, 8
        %s419 = scalar_lea.vmem [#allocation7], %s418
        %s420 = sand.u32 %s167, 1
        %s421 = scalar_lea.sflag [#allocation9], %s420
        %s422 = sand.u32 %s167, 1
        %s423 = smul.addr %s422, 8
        %s424 = scalar_lea.vmem [#allocation8], %s423
        // Predicated region
        $region45: #{dot_product_attention.1} parent=35 // pred_check
          %p425 = pneg %p151
        $region46: #{dot_product_attention.1} parent=35 // pred_check_branch
          %427 = sbr.rel (%p425) target = $region48
        $region47: #{dot_product_attention.1} parent=35 // pred_region
          %429 = vsyncadd %s416, 0
          %s430 = smul.addr %s29, 8
          %s431 = scalar_lea.hbm %s4, %s430
          %s433 = sshll.u32 %s419, 4
          %s434 = int_to_ptr.vmem [resolvable:$true] %s433
          %s435 = sshll.u32 %s431, 4
          %s436 = int_to_ptr.hbm [resolvable:$true] %s435
          %438 = dma.vmem_to_hbm [thread:$0]  %s434, 128, %s436, %s416
        $region48: #{dot_product_attention.1} parent=35 // pred_fallthru
          _
        // Predicated region
        $region49: #{dot_product_attention.1} parent=35 // pred_check
          %p439 = pneg %p177
        $region50: #{dot_product_attention.1} parent=35 // pred_check_branch
          %441 = sbr.rel (%p439) target = $region52
        $region51: #{dot_product_attention.1} parent=35 // pred_region
          %443 = vsyncadd %s421, 0
          %s444 = smul.addr %s29, 8
          %s445 = scalar_lea.hbm %s5, %s444
          %s447 = sshll.u32 %s424, 4
          %s448 = int_to_ptr.vmem [resolvable:$true] %s447
          %s449 = sshll.u32 %s445, 4
          %s450 = int_to_ptr.hbm [resolvable:$true] %s449
          %452 = dma.vmem_to_hbm [thread:$0]  %s448, 128, %s450, %s421
        $region52: #{dot_product_attention.1} parent=35 // pred_fallthru
          _
      $region36: #{dot_product_attention.1} parent=5 // pred_fallthru
        _
      %p453 = scmp.le.s32.totalorder 2, %s24
      // Predicated region
      $region53: #{dot_product_attention.1} parent=5 // pred_check
        %p454 = pneg %p453
      $region54: #{dot_product_attention.1} parent=5 // pred_check_branch
        %456 = sbr.rel (%p454) target = $region56
      $region55: #{dot_product_attention.1} parent=5 // pred_region
        %s457 = ssub.s32 %s24, 2
        // Predicated region
        $region57: #{dot_product_attention.1} parent=55 // pred_check
          %p458 = pneg %p157
        $region58: #{dot_product_attention.1} parent=55 // pred_check_branch
          %460 = sbr.rel (%p458) target = $region60
        $region59: #{dot_product_attention.1} parent=55 // pred_region
          %s461 = sand.u32 %s142, 1
          %s462 = scalar_lea.sflag [#allocation4], %s461
          %s463 = sand.u32 %s142, 1
          %s464 = smul.addr %s463, 8
          %s465 = scalar_lea.vmem [#allocation7], %s464
          %467 = dma.done %s462, 128
        $region60: #{dot_product_attention.1} parent=55 // pred_fallthru
          _
        // Predicated region
        $region61: #{dot_product_attention.1} parent=55 // pred_check
          %p468 = pneg %p183
        $region62: #{dot_product_attention.1} parent=55 // pred_check_branch
          %470 = sbr.rel (%p468) target = $region64
        $region63: #{dot_product_attention.1} parent=55 // pred_region
          %s471 = sand.u32 %s168, 1
          %s472 = scalar_lea.sflag [#allocation9], %s471
          %s473 = sand.u32 %s168, 1
          %s474 = smul.addr %s473, 8
          %s475 = scalar_lea.vmem [#allocation8], %s474
          %477 = dma.done %s472, 128
        $region64: #{dot_product_attention.1} parent=55 // pred_fallthru
          _
      $region56: #{dot_product_attention.1} parent=5 // pred_fallthru
        _
    $region6: #{dot_product_attention.1} parent=1 // loop_footer
      %s28 = sadd.s32 1, %s24
    $region7: #{dot_product_attention.1} parent=1 // loop_footer_branch
      %23 = sbr.rel target = $region3
    $region8: #{dot_product_attention.1} parent=1 // loop_exit
      _
    %478 = vsyncpa [#allocation3], 1
    %s479 = scalar_lea.sflag [#allocation3], 1
    %480 = vsyncpa %s479, 1
    %481 = vsyncpa [#allocation6], 1
    %s482 = scalar_lea.sflag [#allocation6], 1
    %483 = vsyncpa %s482, 1
    %484 = vsyncpa [#allocation4], 1
    %s485 = scalar_lea.sflag [#allocation4], 1
    %486 = vsyncpa %s485, 1
    %487 = vsyncpa [#allocation9], 1
    %s488 = scalar_lea.sflag [#allocation9], 1
    %489 = vsyncpa %s488, 1

</llo_original>
